<compile_context>
chip_gen: v7x
topology: tpu7x:2x2x1
jax: 0.10.0
libtpu: 0.0.40
codegen_flags: <defaults>
</compile_context>

<pallas_src>
import functools

import jax
import jax.numpy as jnp
from jax.experimental import pallas as pl
from jax.experimental.pallas import tpu as pltpu

# ----- module hyperparameters (defaults of PixCNNPrior_v4) -----
FEATURE_INPUT_DIM = 16
OUT_CH = 1
KSIZE = 3
DEPTH = 3
MID_DIM = 32
IN_CH = FEATURE_INPUT_DIM + KSIZE * (KSIZE // 2) + KSIZE // 2  # = 20

_LANE = 128


def _round_up(x, m):
    return ((x + m - 1) // m) * m


def _choose_tiling(B, HW, tile_px_req):
    """Pick (tile_px, chunk, n_hw) so that
       - tile_px is lane-aligned and fitted to HW (small padding waste),
       - tile_px is a multiple of the inner vreg-resident chunk,
       - the grid has >= 2 steps when possible (v7x megacore)."""
    req = max(_LANE, _round_up(int(tile_px_req), _LANE))
    hw_pad = _round_up(HW, _LANE)

    # number of pixel tiles such that each tile <= requested size
    n_hw = pl.cdiv(hw_pad, req)
    # keep both v7x TensorCores busy when the batch alone can't
    if B * n_hw < 2 and hw_pad >= 2 * _LANE:
        n_hw = 2

    # fit the tile to HW so padding waste is bounded by one chunk per tile
    tile_px = _round_up(pl.cdiv(HW, n_hw), _LANE)
    if tile_px % 512 == 0:
        chunk = 512
    elif tile_px % 256 == 0:
        chunk = 256
    else:
        chunk = 128                      # tile_px is always a multiple of 128
    n_hw = pl.cdiv(HW, tile_px)
    return tile_px, chunk, n_hw


def _fused_mlp_kernel(x_ref, w1_ref, b1_ref, w2_ref, b2_ref, w3_ref, b3_ref,
                      o_ref, *, chunk, n_chunks):
    # x_ref: (IN_CH, tile_px) channel-major pixel tile, pixels on the lane axis.
    # w1: (MID_DIM, IN_CH) bf16   w2: (MID_DIM, MID_DIM) bf16
    # w3: (MID_DIM, OUT_CH) f32 (column layout for the VPU/XLU path)
    # b*: (*, 1) f32

    # Hoisted out of the chunk loop: weight reads and bias lane-broadcasts
    # (JAX does not CSE broadcast_in_dim; loading once per grid step is free).
    w1 = w1_ref[...]
    w2 = w2_ref[...]
    w3 = w3_ref[...]
    b1 = jnp.broadcast_to(b1_ref[...], (MID_DIM, chunk))
    b2 = jnp.broadcast_to(b2_ref[...], (MID_DIM, chunk))
    b3 = jnp.broadcast_to(b3_ref[...], (OUT_CH, chunk))

    def body(c, carry):
        p0 = pl.multiple_of(c * chunk, _LANE)
        x = x_ref[:, pl.ds(p0, chunk)].astype(jnp.bfloat16)        # (IN_CH, chunk)

        # layer 1: Conv2d(IN_CH, MID_DIM, 1) + ReLU   (MXU, f32 accumulate)
        h = jnp.dot(w1, x, preferred_element_type=jnp.float32) + b1
        h = jnp.maximum(h, 0.0)

        # layer 2: Conv2d(MID_DIM, MID_DIM, 1) + ReLU (MXU, f32 accumulate)
        h = jnp.dot(w2, h.astype(jnp.bfloat16),
                    preferred_element_type=jnp.float32) + b2
        h = jnp.maximum(h, 0.0)

        # layer 3: Conv2d(MID_DIM, OUT_CH, 1) + Sigmoid.
        # OUT_CH == 1 -> multiply + sublane reduce on VPU/XLU (slots with
        # slack), keeping these vmatmuls off the binding MXU slot.
        if OUT_CH == 1:
            y = jnp.sum(w3 * h, axis=0, keepdims=True) + b3        # (1, chunk) f32
        else:
            y = jnp.dot(w3.T.astype(jnp.bfloat16), h.astype(jnp.bfloat16),
                        preferred_element_type=jnp.float32) + b3
        o_ref[:, pl.ds(p0, chunk)] = jax.nn.sigmoid(y).astype(o_ref.dtype)
        return carry

    jax.lax.fori_loop(0, n_chunks, body, 0, unroll=(n_chunks <= 8))


def pixcnn_prior_v4_forward(x_nchw, params, *, tile_px=32768):
    """x_nchw: (B, IN_CH, H, W) float32.  Returns (B, OUT_CH, H, W) float32."""
    B, C, H, W = x_nchw.shape
    assert C == IN_CH
    HW = H * W

    tile_px, chunk, n_hw = _choose_tiling(B, HW, tile_px)
    n_chunks = tile_px // chunk

    # NCHW is already channel-major per batch element: the reshape is free and
    # no padded copy of the input is materialized (ragged last tile is handled
    # by Pallas boundary-block masking).
    x3d = x_nchw.reshape(B, C, HW)

    w1, b1, w2, b2, w3, b3 = params  # w*: (out, in) f32, b*: (out, 1) f32
    w1b = w1.astype(jnp.bfloat16)
    w2b = w2.astype(jnp.bfloat16)
    w3c = w3.T                       # (MID_DIM, OUT_CH) f32 column for VPU path

    rep = lambda b, i: (0, 0)        # weights/biases: single resident block

    kern = functools.partial(_fused_mlp_kernel, chunk=chunk, n_chunks=n_chunks)

    out3d = pl.pallas_call(
        kern,
        out_shape=jax.ShapeDtypeStruct((B, OUT_CH, HW), jnp.float32),
        grid_spec=pltpu.PrefetchScalarGridSpec(
            num_scalar_prefetch=0,
            grid=(B, n_hw),
            in_specs=[
                # activations: (IN_CH, tile_px) channel-major tile
                pl.BlockSpec((None, IN_CH, tile_px), lambda b, i: (b, 0, i)),
                pl.BlockSpec((MID_DIM, IN_CH), rep),
                pl.BlockSpec((MID_DIM, 1), rep),
                pl.BlockSpec((MID_DIM, MID_DIM), rep),
                pl.BlockSpec((MID_DIM, 1), rep),
                pl.BlockSpec((MID_DIM, OUT_CH), rep),
                pl.BlockSpec((OUT_CH, 1), rep),
            ],
            out_specs=pl.BlockSpec((None, OUT_CH, tile_px), lambda b, i: (b, 0, i)),
        ),
        compiler_params=pltpu.CompilerParams(
            dimension_semantics=("parallel", "parallel"),
            vmem_limit_bytes=32 * 1024 * 1024),
    )(x3d, w1b, b1, w2b, b2, w3c, b3)

    return out3d.reshape(B, OUT_CH, H, W)


def init_params(key):
    """Deterministic synthetic parameters.  Conv2d weights stored as (out, in),
    biases as (out, 1) so the kernel computes W @ x + b in channel-major layout."""
    k1, k2, k3, k4, k5, k6 = jax.random.split(key, 6)
    s1 = 1.0 / jnp.sqrt(IN_CH)
    s2 = 1.0 / jnp.sqrt(MID_DIM)
    w1 = jax.random.uniform(k1, (MID_DIM, IN_CH), jnp.float32, -s1, s1)
    b1 = jax.random.uniform(k2, (MID_DIM, 1), jnp.float32, -s1, s1)
    w2 = jax.random.uniform(k3, (MID_DIM, MID_DIM), jnp.float32, -s2, s2)
    b2 = jax.random.uniform(k4, (MID_DIM, 1), jnp.float32, -s2, s2)
    w3 = jax.random.uniform(k5, (OUT_CH, MID_DIM), jnp.float32, -s2, s2)
    b3 = jax.random.uniform(k6, (OUT_CH, 1), jnp.float32, -s2, s2)
    return (w1, b1, w2, b2, w3, b3)


def _ref_forward_f32(x_nchw, params):
    """Pure-f32 pure-JAX reference (exact module math)."""
    w1, b1, w2, b2, w3, b3 = params
    B, C, H, W = x_nchw.shape
    x = x_nchw.reshape(B, C, H * W)
    h = jnp.maximum(jnp.einsum('oc,bcp->bop', w1, x) + b1[None], 0.0)
    h = jnp.maximum(jnp.einsum('oc,bcp->bop', w2, h) + b2[None], 0.0)
    y = jax.nn.sigmoid(jnp.einsum('oc,bcp->bop', w3, h) + b3[None])
    return y.reshape(B, OUT_CH, H, W)


def _ref_forward_mixed(x_nchw, params):
    """Reference mirroring the kernel's numerics: bf16 MXU operands with f32
    accumulation for layers 1-2, full f32 for the 32->1 VPU layer."""
    w1, b1, w2, b2, w3, b3 = params
    bf = jnp.bfloat16
    B, C, H, W = x_nchw.shape
    x = x_nchw.reshape(B, C, H * W).astype(bf)
    h = jnp.einsum('oc,bcp->bop', w1.astype(bf), x,
                   preferred_element_type=jnp.float32) + b1[None]
    h = jnp.maximum(h, 0.0)
    h = jnp.einsum('oc,bcp->bop', w2.astype(bf), h.astype(bf),
                   preferred_element_type=jnp.float32) + b2[None]
    h = jnp.maximum(h, 0.0)
    y = jnp.einsum('oc,bcp->bop', w3, h) + b3[None]
    return jax.nn.sigmoid(y).reshape(B, OUT_CH, H, W)


if __name__ == "__main__":
    key = jax.random.PRNGKey(0)
    kx, kp = jax.random.split(key)

    B, H, W = 2, 16, 16
    x = jax.random.normal(kx, (B, IN_CH, H, W), dtype=jnp.float32)
    params = init_params(kp)

    out = pixcnn_prior_v4_forward(x, params)
    out = jax.block_until_ready(out)
    assert out.shape == (B, OUT_CH, H, W)

    # Tight check vs. a reference that mirrors the kernel's mixed precision.
    ref_mixed = _ref_forward_mixed(x, params)
    assert jnp.allclose(out, ref_mixed, atol=2e-3, rtol=2e-3), "mismatch vs mixed-precision reference"

    # Loose check vs. the exact f32 module math (bf16 operand rounding only).
    ref_f32 = _ref_forward_f32(x, params)
    assert jnp.allclose(out, ref_f32, atol=3e-2, rtol=0), "mismatch vs f32 reference"

    print("KERNEL_OK")
</pallas_src>

<mosaic_0001>
module attributes {stable_mosaic.version = 11 : i64} {
  func.func @_fused_mlp_kernel(%arg0: i32, %arg1: i32, %arg2: memref<1x20x256xf32, #tpu.memory_space<vmem>>, %arg3: memref<32x20xbf16, #tpu.memory_space<vmem>>, %arg4: memref<32x1xf32, #tpu.memory_space<vmem>>, %arg5: memref<32x32xbf16, #tpu.memory_space<vmem>>, %arg6: memref<32x1xf32, #tpu.memory_space<vmem>>, %arg7: memref<32x1xf32, #tpu.memory_space<vmem>>, %arg8: memref<1x1xf32, #tpu.memory_space<vmem>>, %arg9: memref<1x1x256xf32, #tpu.memory_space<vmem>>) attributes {dimension_semantics = [#tpu.dimension_semantics<parallel>, #tpu.dimension_semantics<parallel>], iteration_bounds = array<i64: 2, 1>, scalar_prefetch = 0 : i64, scratch_operands = 0 : i64, tpu.core_type = #tpu.core_type<tc>, window_params = [{transform_indices = @transform_0, window_bounds = array<i64: 1, 20, 256>}, {pipeline_mode = #tpu.pipeline_mode<synchronous>, transform_indices = @transform_1, window_bounds = array<i64: 32, 20>}, {pipeline_mode = #tpu.pipeline_mode<synchronous>, transform_indices = @transform_2, window_bounds = array<i64: 32, 1>}, {pipeline_mode = #tpu.pipeline_mode<synchronous>, transform_indices = @transform_3, window_bounds = array<i64: 32, 32>}, {pipeline_mode = #tpu.pipeline_mode<synchronous>, transform_indices = @transform_4, window_bounds = array<i64: 32, 1>}, {pipeline_mode = #tpu.pipeline_mode<synchronous>, transform_indices = @transform_5, window_bounds = array<i64: 32, 1>}, {pipeline_mode = #tpu.pipeline_mode<synchronous>, transform_indices = @transform_6, window_bounds = array<i64: 1, 1>}, {transform_indices = @transform_7, window_bounds = array<i64: 1, 1, 256>}]} {
    %c0 = arith.constant 0 : index
    %c0_0 = arith.constant 0 : index
    %0 = vector.load %arg3[%c0, %c0_0] : memref<32x20xbf16, #tpu.memory_space<vmem>>, vector<32x20xbf16>
    %c0_1 = arith.constant 0 : index
    %c0_2 = arith.constant 0 : index
    %1 = vector.load %arg5[%c0_1, %c0_2] : memref<32x32xbf16, #tpu.memory_space<vmem>>, vector<32x32xbf16>
    %c0_3 = arith.constant 0 : index
    %c0_4 = arith.constant 0 : index
    %2 = vector.load %arg7[%c0_3, %c0_4] : memref<32x1xf32, #tpu.memory_space<vmem>>, vector<32x1xf32>
    %c0_5 = arith.constant 0 : index
    %c0_6 = arith.constant 0 : index
    %3 = vector.load %arg4[%c0_5, %c0_6] : memref<32x1xf32, #tpu.memory_space<vmem>>, vector<32x1xf32>
    %4 = vector.shape_cast %3 : vector<32x1xf32> to vector<32x1xf32>
    %5 = vector.broadcast %4 : vector<32x1xf32> to vector<32x256xf32>
    %c0_7 = arith.constant 0 : index
    %c0_8 = arith.constant 0 : index
    %6 = vector.load %arg6[%c0_7, %c0_8] : memref<32x1xf32, #tpu.memory_space<vmem>>, vector<32x1xf32>
    %7 = vector.shape_cast %6 : vector<32x1xf32> to vector<32x1xf32>
    %8 = vector.broadcast %7 : vector<32x1xf32> to vector<32x256xf32>
    %c0_9 = arith.constant 0 : index
    %c0_10 = arith.constant 0 : index
    %9 = vector.load %arg8[%c0_9, %c0_10] : memref<1x1xf32, #tpu.memory_space<vmem>>, vector<1x1xf32>
    %10 = vector.shape_cast %9 : vector<1x1xf32> to vector<1x1xf32>
    %11 = vector.broadcast %10 : vector<1x1xf32> to vector<1x256xf32>
    %c0_i32 = arith.constant 0 : i32
    %c256_i32 = arith.constant 256 : i32
    %12 = arith.muli %c0_i32, %c256_i32 : i32
    %13 = tpu.assume_multiple %12, 128 : i32
    %c0_11 = arith.constant 0 : index
    %c0_12 = arith.constant 0 : index
    %14 = arith.index_cast %13 : i32 to index
    %15 = vector.load %arg2[%c0_11, %c0_12, %14] : memref<1x20x256xf32, #tpu.memory_space<vmem>>, vector<1x20x256xf32>
    %16 = vector.shape_cast %15 : vector<1x20x256xf32> to vector<20x256xf32>
    %17 = arith.truncf %16 : vector<20x256xf32> to vector<20x256xbf16>
    %cst = arith.constant dense<0.000000e+00> : vector<32x256xf32>
    %18 = tpu.matmul %0, %17, %cst {dimension_numbers = #tpu.dot_dimension_numbers<[1], [0], [0], [1], [0, 0, 1, 1], [], []>} : vector<32x20xbf16>, vector<20x256xbf16>, vector<32x256xf32> -> vector<32x256xf32>
    %19 = arith.addf %18, %5 : vector<32x256xf32>
    %cst_13 = arith.constant 0.000000e+00 : f32
    %20 = vector.broadcast %cst_13 : f32 to vector<32x256xf32>
    %21 = arith.maximumf %19, %20 : vector<32x256xf32>
    %22 = arith.truncf %21 : vector<32x256xf32> to vector<32x256xbf16>
    %cst_14 = arith.constant dense<0.000000e+00> : vector<32x256xf32>
    %23 = tpu.matmul %1, %22, %cst_14 {dimension_numbers = #tpu.dot_dimension_numbers<[1], [0], [0], [1], [0, 0, 1, 1], [], []>} : vector<32x32xbf16>, vector<32x256xbf16>, vector<32x256xf32> -> vector<32x256xf32>
    %24 = arith.addf %23, %8 : vector<32x256xf32>
    %cst_15 = arith.constant 0.000000e+00 : f32
    %25 = vector.broadcast %cst_15 : f32 to vector<32x256xf32>
    %26 = arith.maximumf %24, %25 : vector<32x256xf32>
    %27 = vector.broadcast %2 : vector<32x1xf32> to vector<32x256xf32>
    %28 = arith.mulf %27, %26 : vector<32x256xf32>
    %cst_16 = arith.constant dense<0.000000e+00> : vector<256xf32>
    %29 = vector.multi_reduction <add>, %28, %cst_16 [0] : vector<32x256xf32> to vector<256xf32>
    %30 = vector.shape_cast %29 : vector<256xf32> to vector<1x256xf32>
    %31 = arith.addf %30, %11 : vector<1x256xf32>
    %32 = arith.negf %31 : vector<1x256xf32>
    %33 = math.exp %32 : vector<1x256xf32>
    %cst_17 = arith.constant 1.000000e+00 : f32
    %34 = vector.broadcast %cst_17 : f32 to vector<1x256xf32>
    %35 = arith.addf %34, %33 : vector<1x256xf32>
    %36 = arith.divf %34, %35 : vector<1x256xf32>
    %c0_18 = arith.constant 0 : index
    %c0_19 = arith.constant 0 : index
    %37 = arith.index_cast %13 : i32 to index
    %38 = vector.load %arg9[%c0_18, %c0_19, %37] : memref<1x1x256xf32, #tpu.memory_space<vmem>>, vector<1x1x256xf32>
    %39 = vector.shape_cast %38 : vector<1x1x256xf32> to vector<1x256xf32>
    %40 = vector.shape_cast %36 : vector<1x256xf32> to vector<1x1x256xf32>
    tpu.vector_store %arg9[%c0_18, %c0_19, %37], %40 {strides = array<i32>} : memref<1x1x256xf32, #tpu.memory_space<vmem>>, vector<1x1x256xf32>,
    %c1_i32 = arith.constant 1 : i32
    return
  }
  func.func @transform_0(%arg0: i32, %arg1: i32) -> (i32, i32, i32) {
    %c0_i32 = arith.constant 0 : i32
    %c0_i32_0 = arith.constant 0 : i32
    return %arg0, %c0_i32, %arg1 : i32, i32, i32
  }
  func.func @transform_1(%arg0: i32, %arg1: i32) -> (i32, i32) {
    %c0_i32 = arith.constant 0 : i32
    %c0_i32_0 = arith.constant 0 : i32
    %c0_i32_1 = arith.constant 0 : i32
    return %c0_i32, %c0_i32_0 : i32, i32
  }
  func.func @transform_2(%arg0: i32, %arg1: i32) -> (i32, i32) {
    %c0_i32 = arith.constant 0 : i32
    %c0_i32_0 = arith.constant 0 : i32
    %c0_i32_1 = arith.constant 0 : i32
    return %c0_i32, %c0_i32_0 : i32, i32
  }
  func.func @transform_3(%arg0: i32, %arg1: i32) -> (i32, i32) {
    %c0_i32 = arith.constant 0 : i32
    %c0_i32_0 = arith.constant 0 : i32
    %c0_i32_1 = arith.constant 0 : i32
    return %c0_i32, %c0_i32_0 : i32, i32
  }
  func.func @transform_4(%arg0: i32, %arg1: i32) -> (i32, i32) {
    %c0_i32 = arith.constant 0 : i32
    %c0_i32_0 = arith.constant 0 : i32
    %c0_i32_1 = arith.constant 0 : i32
    return %c0_i32, %c0_i32_0 : i32, i32
  }
  func.func @transform_5(%arg0: i32, %arg1: i32) -> (i32, i32) {
    %c0_i32 = arith.constant 0 : i32
    %c0_i32_0 = arith.constant 0 : i32
    %c0_i32_1 = arith.constant 0 : i32
    return %c0_i32, %c0_i32_0 : i32, i32
  }
  func.func @transform_6(%arg0: i32, %arg1: i32) -> (i32, i32) {
    %c0_i32 = arith.constant 0 : i32
    %c0_i32_0 = arith.constant 0 : i32
    %c0_i32_1 = arith.constant 0 : i32
    return %c0_i32, %c0_i32_0 : i32, i32
  }
  func.func @transform_7(%arg0: i32, %arg1: i32) -> (i32, i32, i32) {
    %c0_i32 = arith.constant 0 : i32
    %c0_i32_0 = arith.constant 0 : i32
    return %arg0, %c0_i32, %arg1 : i32, i32, i32
  }
}

</mosaic_0001>

<llo_original>
// kernel: tpu_custom_call.1
$region0: #{tpu_custom_call.1}
  #allocation0 [shape = 'u32[]', space=smem, size = 0x4, offset = 0x4, fixed_abs, tag = 'smem constant byte address 0x4 - core index']
  #allocation1 [shape = 'u32[144,128]{1,0:T(1,128)}', space=vmem, size = 0x12000, scoped, tag = 'internal scratch']
  #allocation2 [shape = 'f32[1,1]{1,0:T(1,128)S(1)}', space=vmem, size = 0x200, scoped, tag = 'scoped memory for tpu_custom_call.1']
  %s0 = inlined_call_operand.vmem [shape: f32[2,20,256], index: 0, kind: input, shape index: {}]
  %s1 = inlined_call_operand.vmem [shape: bf16[32,20], index: 1, kind: input, shape index: {}]
  %s2 = inlined_call_operand.vmem [shape: f32[32,1], index: 2, kind: input, shape index: {}]
  %s3 = inlined_call_operand.vmem [shape: bf16[32,32], index: 3, kind: input, shape index: {}]
  %s4 = inlined_call_operand.vmem [shape: f32[32,1], index: 4, kind: input, shape index: {}]
  %s5 = inlined_call_operand.vmem [shape: f32[32,1], index: 5, kind: input, shape index: {}]
  %s6 = inlined_call_operand.<no memory space> [shape: f32[1,1], index: 6, kind: input, shape index: {}]
  %s7 = inlined_call_operand.hbm [shape: f32[2,1,256], index: 7, kind: output, shape index: {}]
  %s8 = sld [smem:[#allocation0]]
  $region61: #{tpu_custom_call.1} parent=0
    _
  %s10 = ssub.s32 1, %s8
  %s11 = scalar_select 0, %s10, %s8
  %v12 = vstv %s6
  %13 = vst [vmem:[#allocation2] sm:$0x1] %v12
  $region1: #{tpu_custom_call.1} parent=0
    #allocation3 [shape = 'u8[2048]{0}', space=vmem, size = 0x800, scoped, tag = 'output window, operand 0']
    #allocation4 [shape = 's32[2]{0}', space=sflag, size = 0x8, scoped, tag = 'scoped memory for tpu_custom_call.1']
    %14 = vsyncpa [#allocation4], 0
    %s15 = scalar_lea.sflag [#allocation4], 1
    %16 = vsyncpa %s15, 0
    loop: start=0, step=1, limit=4
    $region2: #{tpu_custom_call.1} parent=1 // loop_pre_header
      _
    $region3: #{tpu_custom_call.1} parent=1 // loop_header
      %s18 = sphi 0, %s22
      %p19 = scmp.ge.s32.totalorder %s18, 4
      %s25 = sphi 0, %s37
      %s26 = sphi 0, %s33
      %s27 = sphi 0, %s25
      %s28 = sphi 0, %s26
      %s29 = sphi 0, %s27
      %s30 = sphi 0, %s28
      %s42 = sphi 0, %s44
      %s45 = sphi 0, %s42
      %s46 = sphi 0, %s45
      %s62 = sphi 0, %s46
      %s66 = sphi 0, %s66
      %s68 = sphi 0, %s66
      %s69 = sphi 0, %s68
      %s83 = sphi 0, %s69
      %s87 = sphi 0, %s87
      %s89 = sphi 0, %s87
      %s90 = sphi 0, %s89
      %s104 = sphi 0, %s90
      %s108 = sphi 0, %s108
      %s110 = sphi 0, %s108
      %s111 = sphi 0, %s110
      %s125 = sphi 0, %s111
      %s129 = sphi 0, %s129
      %s131 = sphi 0, %s129
      %s132 = sphi 0, %s131
      %s146 = sphi 0, %s132
      %s150 = sphi 0, %s150
      %s152 = sphi 0, %s150
      %s153 = sphi 0, %s152
      %s167 = sphi 0, %s153
      %s171 = sphi 0, %s171
      %s173 = sphi 0, %s171
      %s174 = sphi 0, %s173
      %s188 = sphi 0, %s174
      %s196 = sphi 0, %s198
      %s199 = sphi 0, %s196
      %s200 = sphi 0, %s199
      %s216 = sphi 0, %s200
    $region4: #{tpu_custom_call.1} parent=1 // loop_header_branch
      %21 = sbr.rel (%p19) target = $region8
    $region5: #{tpu_custom_call.1} parent=1 // loop_body
      %s23 = ssub.s32 %s18, 1
      %s24 = ssub.s32 %s18, 2
      %s31 = sadd.s32 1, %s26
      %p32 = scmp.ge.s32.totalorder %s31, 1
      %s33 = scalar_select %p32, 0, %s31
      %s34 = sadd.s32 1, %s25
      %s35 = scalar_select %p32, %s34, %s25
      %p36 = scmp.ge.s32.totalorder %s35, 2
      %s37 = scalar_select %p36, 0, %s35
      %s38 = ssub.s32 %s25, %s37
      %s39 = ssub.s32 %s26, %s33
      %s40 = sor.u32 %s38, %s39
      %p41 = scmp.eq.s32.totalorder %s40, 0
      %s43 = sadd.s32 %s42, 1
      %s44 = scalar_select %p41, %s42, %s43
      %p47 = pneg %p41
      %p48 = scmp.eq.s32.totalorder %s18, 1
      %p49 = por %p47, %p48
      %p50 = scmp.ne.s32.totalorder %s42, %s45
      %p51 = scmp.eq.s32.totalorder %s18, 0
      %p52 = por %p50, %p51
      %p53 = scmp.ne.s32.totalorder %s42, %s45
      %p54 = scmp.eq.s32.totalorder %s23, 1
      %p55 = por %p53, %p54
      %p56 = scmp.ne.s32.totalorder %s45, %s46
      %p57 = scmp.eq.s32.totalorder %s23, 0
      %p58 = por %p56, %p57
      %p59 = scmp.ne.s32.totalorder %s45, %s46
      %p60 = scmp.eq.s32.totalorder %s24, 1
      %p61 = por %p59, %p60
      %p63 = scmp.ne.s32.totalorder %s46, %s62
      %p64 = scmp.eq.s32.totalorder %s24, 0
      %p65 = por %p63, %p64
      %s67 = sadd.s32 %s66, 1
      %p70 = scmp.eq.s32.totalorder %s18, 1
      %p71 = scmp.ne.s32.totalorder %s66, %s68
      %p72 = scmp.eq.s32.totalorder %s18, 0
      %p73 = por %p71, %p72
      %p74 = scmp.ne.s32.totalorder %s66, %s68
      %p75 = scmp.eq.s32.totalorder %s23, 1
      %p76 = por %p74, %p75
      %p77 = scmp.ne.s32.totalorder %s68, %s69
      %p78 = scmp.eq.s32.totalorder %s23, 0
      %p79 = por %p77, %p78
      %p80 = scmp.ne.s32.totalorder %s68, %s69
      %p81 = scmp.eq.s32.totalorder %s24, 1
      %p82 = por %p80, %p81
      %p84 = scmp.ne.s32.totalorder %s69, %s83
      %p85 = scmp.eq.s32.totalorder %s24, 0
      %p86 = por %p84, %p85
      %s88 = sadd.s32 %s87, 1
      %p91 = scmp.eq.s32.totalorder %s18, 1
      %p92 = scmp.ne.s32.totalorder %s87, %s89
      %p93 = scmp.eq.s32.totalorder %s18, 0
      %p94 = por %p92, %p93
      %p95 = scmp.ne.s32.totalorder %s87, %s89
      %p96 = scmp.eq.s32.totalorder %s23, 1
      %p97 = por %p95, %p96
      %p98 = scmp.ne.s32.totalorder %s89, %s90
      %p99 = scmp.eq.s32.totalorder %s23, 0
      %p100 = por %p98, %p99
      %p101 = scmp.ne.s32.totalorder %s89, %s90
      %p102 = scmp.eq.s32.totalorder %s24, 1
      %p103 = por %p101, %p102
      %p105 = scmp.ne.s32.totalorder %s90, %s104
      %p106 = scmp.eq.s32.totalorder %s24, 0
      %p107 = por %p105, %p106
      %s109 = sadd.s32 %s108, 1
      %p112 = scmp.eq.s32.totalorder %s18, 1
      %p113 = scmp.ne.s32.totalorder %s108, %s110
      %p114 = scmp.eq.s32.totalorder %s18, 0
      %p115 = por %p113, %p114
      %p116 = scmp.ne.s32.totalorder %s108, %s110
      %p117 = scmp.eq.s32.totalorder %s23, 1
      %p118 = por %p116, %p117
      %p119 = scmp.ne.s32.totalorder %s110, %s111
      %p120 = scmp.eq.s32.totalorder %s23, 0
      %p121 = por %p119, %p120
      %p122 = scmp.ne.s32.totalorder %s110, %s111
      %p123 = scmp.eq.s32.totalorder %s24, 1
      %p124 = por %p122, %p123
      %p126 = scmp.ne.s32.totalorder %s111, %s125
      %p127 = scmp.eq.s32.totalorder %s24, 0
      %p128 = por %p126, %p127
      %s130 = sadd.s32 %s129, 1
      %p133 = scmp.eq.s32.totalorder %s18, 1
      %p134 = scmp.ne.s32.totalorder %s129, %s131
      %p135 = scmp.eq.s32.totalorder %s18, 0
      %p136 = por %p134, %p135
      %p137 = scmp.ne.s32.totalorder %s129, %s131
      %p138 = scmp.eq.s32.totalorder %s23, 1
      %p139 = por %p137, %p138
      %p140 = scmp.ne.s32.totalorder %s131, %s132
      %p141 = scmp.eq.s32.totalorder %s23, 0
      %p142 = por %p140, %p141
      %p143 = scmp.ne.s32.totalorder %s131, %s132
      %p144 = scmp.eq.s32.totalorder %s24, 1
      %p145 = por %p143, %p144
      %p147 = scmp.ne.s32.totalorder %s132, %s146
      %p148 = scmp.eq.s32.totalorder %s24, 0
      %p149 = por %p147, %p148
      %s151 = sadd.s32 %s150, 1
      %p154 = scmp.eq.s32.totalorder %s18, 1
      %p155 = scmp.ne.s32.totalorder %s150, %s152
      %p156 = scmp.eq.s32.totalorder %s18, 0
      %p157 = por %p155, %p156
      %p158 = scmp.ne.s32.totalorder %s150, %s152
      %p159 = scmp.eq.s32.totalorder %s23, 1
      %p160 = por %p158, %p159
      %p161 = scmp.ne.s32.totalorder %s152, %s153
      %p162 = scmp.eq.s32.totalorder %s23, 0
      %p163 = por %p161, %p162
      %p164 = scmp.ne.s32.totalorder %s152, %s153
      %p165 = scmp.eq.s32.totalorder %s24, 1
      %p166 = por %p164, %p165
      %p168 = scmp.ne.s32.totalorder %s153, %s167
      %p169 = scmp.eq.s32.totalorder %s24, 0
      %p170 = por %p168, %p169
      %s172 = sadd.s32 %s171, 1
      %p175 = scmp.eq.s32.totalorder %s18, 1
      %p176 = scmp.ne.s32.totalorder %s171, %s173
      %p177 = scmp.eq.s32.totalorder %s18, 0
      %p178 = por %p176, %p177
      %p179 = scmp.ne.s32.totalorder %s171, %s173
      %p180 = scmp.eq.s32.totalorder %s23, 1
      %p181 = por %p179, %p180
      %p182 = scmp.ne.s32.totalorder %s173, %s174
      %p183 = scmp.eq.s32.totalorder %s23, 0
      %p184 = por %p182, %p183
      %p185 = scmp.ne.s32.totalorder %s173, %s174
      %p186 = scmp.eq.s32.totalorder %s24, 1
      %p187 = por %p185, %p186
      %p189 = scmp.ne.s32.totalorder %s174, %s188
      %p190 = scmp.eq.s32.totalorder %s24, 0
      %p191 = por %p189, %p190
      %s192 = ssub.s32 %s25, %s37
      %s193 = ssub.s32 %s26, %s33
      %s194 = sor.u32 %s192, %s193
      %p195 = scmp.eq.s32.totalorder %s194, 0
      %s197 = sadd.s32 %s196, 1
      %s198 = scalar_select %p195, %s196, %s197
      %p201 = pneg %p195
      %p202 = scmp.eq.s32.totalorder %s18, 1
      %p203 = por %p201, %p202
      %p204 = scmp.ne.s32.totalorder %s196, %s199
      %p205 = scmp.eq.s32.totalorder %s18, 0
      %p206 = por %p204, %p205
      %p207 = scmp.ne.s32.totalorder %s196, %s199
      %p208 = scmp.eq.s32.totalorder %s23, 1
      %p209 = por %p207, %p208
      %p210 = scmp.ne.s32.totalorder %s199, %s200
      %p211 = scmp.eq.s32.totalorder %s23, 0
      %p212 = por %p210, %p211
      %p213 = scmp.ne.s32.totalorder %s199, %s200
      %p214 = scmp.eq.s32.totalorder %s24, 1
      %p215 = por %p213, %p214
      %p217 = scmp.ne.s32.totalorder %s200, %s216
      %p218 = scmp.eq.s32.totalorder %s24, 0
      %p219 = por %p217, %p218
      %p220 = scmp.le.s32.totalorder 1, %s18
      %p221 = scmp.lt.s32.totalorder %s18, 3
      %p222 = pnand %p220, %p221
      %p223 = pneg %p222
      // Predicated region
      $region9: #{tpu_custom_call.1} parent=5 // pred_check
        _
      $region10: #{tpu_custom_call.1} parent=5 // pred_check_branch
        %225 = sbr.rel (%p222) target = $region12
      $region11: #{tpu_custom_call.1} parent=5 // pred_region
        %s226 = ssub.s32 %s18, 1
        // Predicated region
        $region13: #{tpu_custom_call.1} parent=11 // pred_check
          %p227 = pneg %p79
        $region14: #{tpu_custom_call.1} parent=11 // pred_check_branch
          %229 = sbr.rel (%p227) target = $region16
        $region15: #{tpu_custom_call.1} parent=11 // pred_region
          _
        $region16: #{tpu_custom_call.1} parent=11 // pred_fallthru
          _
        // Predicated region
        $region17: #{tpu_custom_call.1} parent=11 // pred_check
          %p230 = pneg %p100
        $region18: #{tpu_custom_call.1} parent=11 // pred_check_branch
          %232 = sbr.rel (%p230) target = $region20
        $region19: #{tpu_custom_call.1} parent=11 // pred_region
          _
        $region20: #{tpu_custom_call.1} parent=11 // pred_fallthru
          _
        // Predicated region
        $region21: #{tpu_custom_call.1} parent=11 // pred_check
          %p233 = pneg %p121
        $region22: #{tpu_custom_call.1} parent=11 // pred_check_branch
          %235 = sbr.rel (%p233) target = $region24
        $region23: #{tpu_custom_call.1} parent=11 // pred_region
          _
        $region24: #{tpu_custom_call.1} parent=11 // pred_fallthru
          _
        // Predicated region
        $region25: #{tpu_custom_call.1} parent=11 // pred_check
          %p236 = pneg %p142
        $region26: #{tpu_custom_call.1} parent=11 // pred_check_branch
          %238 = sbr.rel (%p236) target = $region28
        $region27: #{tpu_custom_call.1} parent=11 // pred_region
          _
        $region28: #{tpu_custom_call.1} parent=11 // pred_fallthru
          _
        // Predicated region
        $region29: #{tpu_custom_call.1} parent=11 // pred_check
          %p239 = pneg %p163
        $region30: #{tpu_custom_call.1} parent=11 // pred_check_branch
          %241 = sbr.rel (%p239) target = $region32
        $region31: #{tpu_custom_call.1} parent=11 // pred_region
          _
        $region32: #{tpu_custom_call.1} parent=11 // pred_fallthru
          _
        // Predicated region
        $region33: #{tpu_custom_call.1} parent=11 // pred_check
          %p242 = pneg %p184
        $region34: #{tpu_custom_call.1} parent=11 // pred_check_branch
          %244 = sbr.rel (%p242) target = $region36
        $region35: #{tpu_custom_call.1} parent=11 // pred_region
          _
        $region36: #{tpu_custom_call.1} parent=11 // pred_fallthru
          _
      $region12: #{tpu_custom_call.1} parent=5 // pred_fallthru
        _
      %p245 = scmp.lt.s32.totalorder %s18, 2
      // Predicated region
      $region37: #{tpu_custom_call.1} parent=5 // pred_check
        %p246 = pneg %p245
      $region38: #{tpu_custom_call.1} parent=5 // pred_check_branch
        %248 = sbr.rel (%p246) target = $region40
      $region39: #{tpu_custom_call.1} parent=5 // pred_region
        // Predicated region
        $region41: #{tpu_custom_call.1} parent=39 // pred_check
          %p249 = pneg %p52
        $region42: #{tpu_custom_call.1} parent=39 // pred_check_branch
          %251 = sbr.rel (%p249) target = $region44
        $region43: #{tpu_custom_call.1} parent=39 // pred_region
          %s252 = smul.u32 2, %s26
          %p253 = scmp.lt.s32.totalorder %s25, 1
          %s254 = scalar_select %p253, %s25, 1
          %p255 = scmp.lt.s32.totalorder %s252, 1
          %s256 = scalar_select %p255, %s252, 1
          %s257 = smul.addr %s254, 6
          %s258 = sadd.s32 %s256, %s257
          %s259 = smul.addr %s258, 8
          %s260 = scalar_lea.vmem %s0, %s259
          %s261 = smul.u32 2, %s26
        $region44: #{tpu_custom_call.1} parent=39 // pred_fallthru
          _
      $region40: #{tpu_custom_call.1} parent=5 // pred_fallthru
        _
      %p262 = scmp.le.s32.totalorder 1, %s18
      %p263 = scmp.lt.s32.totalorder %s18, 3
      %p264 = pnand %p262, %p263
      %p265 = pneg %p264
      // Predicated region
      $region45: #{tpu_custom_call.1} parent=5 // pred_check
        _
      $region46: #{tpu_custom_call.1} parent=5 // pred_check_branch
        %267 = sbr.rel (%p264) target = $region48
      $region47: #{tpu_custom_call.1} parent=5 // pred_region
        %s268 = ssub.s32 %s18, 1
        %s269 = smul.u32 2, %s28
        %p270 = scmp.lt.s32.totalorder %s27, 1
        %s271 = scalar_select %p270, %s27, 1
        %p272 = scmp.lt.s32.totalorder %s269, 1
        %s273 = scalar_select %p272, %s269, 1
        %s274 = smul.addr %s271, 6
        %s275 = sadd.s32 %s273, %s274
        %s276 = smul.addr %s275, 8
        %s277 = scalar_lea.vmem %s0, %s276
        %p278 = pneg %p58
        %p279 = pneg %p55
        %p280 = pneg %p79
        %p281 = pneg %p76
        %p282 = pneg %p100
        %p283 = pneg %p97
        %p284 = pneg %p121
        %p285 = pneg %p118
        %p286 = pneg %p142
        %p287 = pneg %p139
        %p288 = pneg %p163
        %p289 = pneg %p160
        %p290 = pneg %p184
        %p291 = pneg %p181
        %p292 = pneg %p212
        %p293 = pneg %p209
        %s294 = sand.u32 %s199, 1
        %s295 = scalar_lea.sflag [#allocation4], %s294
        %s296 = sand.u32 %s199, 1
        %s297 = smul.addr %s296, 2
        %s298 = scalar_lea.vmem [#allocation3], %s297
        %s299 = smul.u32 2, %s28
        %p300 = scmp.lt.s32.totalorder %s27, 1
        %s301 = scalar_select %p300, %s27, 1
        %p302 = scmp.lt.s32.totalorder %s299, 1
        %s303 = scalar_select %p302, %s299, 1
        %s304 = smul.addr %s301, 6
        %s305 = sadd.s32 %s303, %s304
        %s306 = smul.addr %s305, 8
        %s307 = scalar_lea.vmem %s0, %s306
        %s308 = smul.u32 2, %s28
        %s309 = smul.u32 2, %s28
        %v311 = vld [vmem:[%s1] sm:$0xf]
        %v312 = vld [vmem:[%s1 + $0x4] sm:$0xf]
        %v313 = vld [vmem:[%s1 + $0x8] sm:$0xf]
        %v314 = vld [vmem:[%s1 + $0xc] sm:$0xf]
        %v315 = vld [vmem:[%s3] sm:$0xf]
        %v316 = vld [vmem:[%s3 + $0x4] sm:$0xf]
        %v317 = vld [vmem:[%s3 + $0x8] sm:$0xf]
        %v318 = vld [vmem:[%s3 + $0xc] sm:$0xf]
        %v319 = vld [vmem:[%s5] sm:$0xff]
        %v320 = vld [vmem:[%s5 + $0x8] sm:$0xff]
        %v321 = vld [vmem:[%s5 + $0x10] sm:$0xff]
        %v322 = vld [vmem:[%s5 + $0x18] sm:$0xff]
        %v323 = vld [vmem:[%s2] sm:$0xff]
        %v324 = vld [vmem:[%s2 + $0x8] sm:$0xff]
        %v325 = vld [vmem:[%s2 + $0x10] sm:$0xff]
        %v326 = vld [vmem:[%s2 + $0x18] sm:$0xff]
        %328 = vset.pattern.permute.xlu0 0
        %329 = vperm.xlu0 %328, %v323
        %v330 = vpop.permute.xlu0 %329
        %333 = vset.pattern.permute.xlu0 0
        %334 = vperm.xlu0 %333, %v324
        %v335 = vpop.permute.xlu0 %334
        %338 = vset.pattern.permute.xlu0 0
        %339 = vperm.xlu0 %338, %v325
        %v340 = vpop.permute.xlu0 %339
        %343 = vset.pattern.permute.xlu0 0
        %344 = vperm.xlu0 %343, %v326
        %v345 = vpop.permute.xlu0 %344
        %v347 = vld [vmem:[%s4] sm:$0xff]
        %v348 = vld [vmem:[%s4 + $0x8] sm:$0xff]
        %v349 = vld [vmem:[%s4 + $0x10] sm:$0xff]
        %v350 = vld [vmem:[%s4 + $0x18] sm:$0xff]
        %352 = vset.pattern.permute.xlu0 0
        %353 = vperm.xlu0 %352, %v347
        %v354 = vpop.permute.xlu0 %353
        %357 = vset.pattern.permute.xlu0 0
        %358 = vperm.xlu0 %357, %v348
        %v359 = vpop.permute.xlu0 %358
        %362 = vset.pattern.permute.xlu0 0
        %363 = vperm.xlu0 %362, %v349
        %v364 = vpop.permute.xlu0 %363
        %367 = vset.pattern.permute.xlu0 0
        %368 = vperm.xlu0 %367, %v350
        %v369 = vpop.permute.xlu0 %368
        %v371 = vld [vmem:[#allocation2] sm:$0x1]
        %373 = vset.pattern.permute.xlu0 0
        %374 = vperm.xlu0 %373, %v371
        %v375 = vpop.permute.xlu0 %374
        %v377 = vlaneseq
        %v378 = vshrl.u32 %v377, 7
        %v379 = vsub.s32 0, %v378
        %v380 = vrot.slane %v375, %v379
        %v381 = vld [vmem:[%s307] sm:$0xff]
        %v382 = vld [vmem:[%s307 + $0x8] sm:$0xff]
        %v383 = vld [vmem:[%s307 + $0x10] sm:$0xff]
        %v384 = vld [vmem:[%s307 + $0x18] sm:$0xff]
        %v385 = vld [vmem:[%s307 + $0x20] sm:$0xf]
        %v386 = vld [vmem:[%s307 + $0x28] sm:$0xf]
        %v387 = vpack.c.bf16 %v383, %v381
        %v388 = vpack.c.bf16 %v384, %v382
        %v389 = vpack.c.bf16 %v385, %v385
        %v390 = vpack.c.bf16 %v386, %v386
        %v395 = vunpack.c.l.b16 %v311
        %v396 = vunpack.c.l.b16 %v312
        %v397 = vunpack.c.l.b16 %v313
        %v398 = vunpack.c.l.b16 %v314
        %v399 = vpack.c.b16 %v396, %v395
        %v400 = vpack.c.b16 %v398, %v397
        %vm401 = vcmask 162816
        %v403 = vsel %vm401, %v399, 0
        %v406 = vsel %vm401, %v400, 0
        %vm408 = vcmask 1041408
        %v410 = vsel %vm408, %v389, 0
        %v413 = vsel %vm408, %v390, 0
        %415 = vmatprep.subr.bf16.mxu0 %v388
        %416 = vmatpush1.bf16.msra.mxu0 %v387
        %417 = vmatprep.subr.bf16.mxu0 %v413
        %418 = vmatpush1.bf16.msra.mxu0 %v410
        %419 = vmatprep.subr.bf16.mxu0 0
        %420 = vmatpush1.bf16.msra.mxu0 0
        %421 = vmatprep.subr.bf16.mxu0 0
        %422 = vmatpush1.bf16.msra.mxu0 0
        %423 = vmatprep.subr.bf16.mxu0 0
        %424 = vmatpush1.bf16.msra.mxu0 0
        %425 = vmatprep.subr.bf16.mxu0 0
        %426 = vmatpush1.bf16.msra.mxu0 0
        %427 = vmatprep.subr.bf16.mxu0 0
        %428 = vmatpush1.bf16.msra.mxu0 0
        %429 = vmatprep.subr.bf16.mxu0 0
        %430 = vmatpush1.bf16.msra.mxu0 0
        %431 = vmatprep.subr.bf16.mxu0 0
        %432 = vmatpush1.bf16.msra.mxu0 0
        %433 = vmatprep.subr.bf16.mxu0 0
        %434 = vmatpush1.bf16.msra.mxu0 0
        %435 = vmatprep.subr.bf16.mxu0 0
        %436 = vmatpush1.bf16.msra.mxu0 0
        %437 = vmatprep.subr.bf16.mxu0 0
        %438 = vmatpush1.bf16.msra.mxu0 0
        %439 = vmatprep.subr.bf16.mxu0 0
        %440 = vmatpush1.bf16.msra.mxu0 0
        %441 = vmatprep.subr.bf16.mxu0 0
        %442 = vmatpush1.bf16.msra.mxu0 0
        %443 = vmatprep.subr.bf16.mxu0 0
        %444 = vmatpush1.bf16.msra.mxu0 0
        %445 = vmatprep.subr.bf16.mxu0 0
        %446 = vmatpush1.bf16.msra.mxu0 0
        %447 = vmatprep.mubr.bf16.mxu0 0
        %448 = vmatmul.mubr.bf16.gmra.mrb[0].mxu0 %v403
        %v449 = vpop.f32.mrb[0].mxu0
        %v450 = vadd.f32 %v330, %v449
        %v451 = vpop.f32.mrb[0].mxu0
        %v452 = vadd.f32 %v330, %v451
        %v453 = vpop.f32.mrb[0].mxu0
        %v454 = vadd.f32 %v335, %v453
        %v455 = vpop.f32.mrb[0].mxu0
        %v456 = vadd.f32 %v335, %v455
        %457 = vmatprep.mubr.bf16.mxu0 0
        %458 = vmatmul.mubr.bf16.gmra.mrb[0].mxu0 %v406
        %v459 = vpop.f32.mrb[0].mxu0
        %v460 = vadd.f32 %v340, %v459
        %v461 = vpop.f32.mrb[0].mxu0
        %v462 = vadd.f32 %v340, %v461
        %v463 = vpop.f32.mrb[0].mxu0
        %v464 = vadd.f32 %v345, %v463
        %v465 = vpop.f32.mrb[0].mxu0
        %v466 = vadd.f32 %v345, %v465
        %467 = vdwg.mxu0
        %v468 = vmax.f32 %v450, 0.0
        %v469 = vmax.f32 %v452, 0.0
        %v470 = vmax.f32 %v454, 0.0
        %v471 = vmax.f32 %v456, 0.0
        %v472 = vmax.f32 %v460, 0.0
        %v473 = vmax.f32 %v462, 0.0
        %v474 = vmax.f32 %v464, 0.0
        %v475 = vmax.f32 %v466, 0.0
        %v476 = vpack.c.bf16 %v470, %v468
        %v477 = vpack.c.bf16 %v471, %v469
        %v478 = vpack.c.bf16 %v474, %v472
        %v479 = vpack.c.bf16 %v475, %v473
        %v484 = vunpack.c.l.b16 %v315
        %v485 = vunpack.c.l.b16 %v316
        %v486 = vunpack.c.l.b16 %v317
        %v487 = vunpack.c.l.b16 %v318
        %v488 = vpack.c.b16 %v485, %v484
        %v489 = vpack.c.b16 %v487, %v486
        %vm490 = vcmask 261120
        %v492 = vsel %vm490, %v488, 0
        %v495 = vsel %vm490, %v489, 0
        %497 = vmatprep.subr.bf16.mxu0 %v477
        %498 = vmatpush1.bf16.msra.mxu0 %v476
        %499 = vmatprep.subr.bf16.mxu0 %v479
        %500 = vmatpush1.bf16.msra.mxu0 %v478
        %501 = vmatprep.subr.bf16.mxu0 0
        %502 = vmatpush1.bf16.msra.mxu0 0
        %503 = vmatprep.subr.bf16.mxu0 0
        %504 = vmatpush1.bf16.msra.mxu0 0
        %505 = vmatprep.subr.bf16.mxu0 0
        %506 = vmatpush1.bf16.msra.mxu0 0
        %507 = vmatprep.subr.bf16.mxu0 0
        %508 = vmatpush1.bf16.msra.mxu0 0
        %509 = vmatprep.subr.bf16.mxu0 0
        %510 = vmatpush1.bf16.msra.mxu0 0
        %511 = vmatprep.subr.bf16.mxu0 0
        %512 = vmatpush1.bf16.msra.mxu0 0
        %513 = vmatprep.subr.bf16.mxu0 0
        %514 = vmatpush1.bf16.msra.mxu0 0
        %515 = vmatprep.subr.bf16.mxu0 0
        %516 = vmatpush1.bf16.msra.mxu0 0
        %517 = vmatprep.subr.bf16.mxu0 0
        %518 = vmatpush1.bf16.msra.mxu0 0
        %519 = vmatprep.subr.bf16.mxu0 0
        %520 = vmatpush1.bf16.msra.mxu0 0
        %521 = vmatprep.subr.bf16.mxu0 0
        %522 = vmatpush1.bf16.msra.mxu0 0
        %523 = vmatprep.subr.bf16.mxu0 0
        %524 = vmatpush1.bf16.msra.mxu0 0
        %525 = vmatprep.subr.bf16.mxu0 0
        %526 = vmatpush1.bf16.msra.mxu0 0
        %527 = vmatprep.subr.bf16.mxu0 0
        %528 = vmatpush1.bf16.msra.mxu0 0
        %529 = vmatprep.mubr.bf16.mxu0 0
        %530 = vmatmul.mubr.bf16.gmra.mrb[0].mxu0 %v492
        %v531 = vpop.f32.mrb[0].mxu0
        %v532 = vadd.f32 %v354, %v531
        %v533 = vpop.f32.mrb[0].mxu0
        %v534 = vadd.f32 %v354, %v533
        %v535 = vpop.f32.mrb[0].mxu0
        %v536 = vadd.f32 %v359, %v535
        %v537 = vpop.f32.mrb[0].mxu0
        %v538 = vadd.f32 %v359, %v537
        %539 = vmatprep.mubr.bf16.mxu0 0
        %540 = vmatmul.mubr.bf16.gmra.mrb[0].mxu0 %v495
        %v541 = vpop.f32.mrb[0].mxu0
        %v542 = vadd.f32 %v364, %v541
        %v543 = vpop.f32.mrb[0].mxu0
        %v544 = vadd.f32 %v364, %v543
        %v545 = vpop.f32.mrb[0].mxu0
        %v546 = vadd.f32 %v369, %v545
        %v547 = vpop.f32.mrb[0].mxu0
        %v548 = vadd.f32 %v369, %v547
        %549 = vdwg.mxu0
        %v550 = vmax.f32 %v532, 0.0
        %v551 = vmax.f32 %v534, 0.0
        %v552 = vmax.f32 %v536, 0.0
        %v553 = vmax.f32 %v538, 0.0
        %v554 = vmax.f32 %v542, 0.0
        %v555 = vmax.f32 %v544, 0.0
        %v556 = vmax.f32 %v546, 0.0
        %v557 = vmax.f32 %v548, 0.0
        %559 = vset.pattern.permute.xlu0 0
        %560 = vperm.xlu0 %559, %v319
        %v561 = vpop.permute.xlu0 %560
        %564 = vset.pattern.permute.xlu0 0
        %565 = vperm.xlu0 %564, %v320
        %v566 = vpop.permute.xlu0 %565
        %569 = vset.pattern.permute.xlu0 0
        %570 = vperm.xlu0 %569, %v321
        %v571 = vpop.permute.xlu0 %570
        %574 = vset.pattern.permute.xlu0 0
        %575 = vperm.xlu0 %574, %v322
        %v576 = vpop.permute.xlu0 %575
        %v578 = vmul.f32 %v561, %v550
        %v579 = vmul.f32 %v561, %v551
        %v580 = vmul.f32 %v566, %v552
        %v581 = vmul.f32 %v566, %v553
        %v582 = vmul.f32 %v571, %v554
        %v583 = vmul.f32 %v571, %v555
        %v584 = vmul.f32 %v576, %v556
        %v585 = vmul.f32 %v576, %v557
        %v586 = vadd.f32 %v578, %v580
        %v587 = vadd.f32 %v586, %v582
        %v588 = vadd.f32 %v587, %v584
        %v589 = vrot.slane %v588, 4
        %v590 = vadd.f32 %v588, %v589
        %v591 = vrot.slane %v590, 2
        %v592 = vadd.f32 %v590, %v591
        %v593 = vrot.slane %v592, 1
        %v594 = vadd.f32 %v592, %v593
        %v595 = vadd.f32 %v579, %v581
        %v596 = vadd.f32 %v595, %v583
        %v597 = vadd.f32 %v596, %v585
        %v598 = vrot.slane %v597, 4
        %v599 = vadd.f32 %v597, %v598
        %v600 = vrot.slane %v599, 2
        %v601 = vadd.f32 %v599, %v600
        %v602 = vrot.slane %v601, 1
        %v603 = vadd.f32 %v601, %v602
        %v604 = vadd.f32 %v594, %v380
        %v605 = vadd.f32 %v603, %v380
        %v606 = vxor.u32 %v604, 2147483648
        %v607 = vxor.u32 %v605, 2147483648
        %v608 = vmul.f32 %v606, 1.442695
        %v609 = vpow.pop %v608
        %v610 = vmul.f32 %v607, 1.442695
        %v611 = vpow.pop %v610
        %v612 = vadd.f32 %v609, 1.0
        %v613 = vadd.f32 %v611, 1.0
        %v614 = vrcp.pop %v612
        %v615 = vmul.f32 1.0, %v614
        %v616 = vrcp.pop %v613
        %v617 = vmul.f32 1.0, %v616
        %v620 = vcombine.low %v615, %v617
        %v622 = vunpack.c.l.s4 1966171168
        %v623 = vunpack.c.0.s8 %v622
        %v624 = vlaneseq
        %v625 = vshrl.u32 %v624, 7
        %v626 = vsub.s32 %v623, %v625
        %v627 = vrot.slane %v620, %v626
        %v629 = vunpack.c.l.s4 1966171168
        %v630 = vunpack.c.0.s8 %v629
        %v631 = vlaneseq
        %v632 = vshrl.u32 %v631, 7
        %v633 = vsub.s32 %v630, %v632
        %v634 = vrot.slane %v627, %v633
        %v636 = vlaneseq
        %vm637 = vcmp.ge.s32.totalorder %v636, 0
        %vm638 = vcmp.lt.s32.totalorder %v636, 256
        %vm639 = vmand %vm637, %vm638
        %640 = vst.msk [vmem:[%s298] sm:$0x3] %vm639, %v634
        %s641 = sand.u32 %s199, 1
        %s642 = scalar_lea.sflag [#allocation4], %s641
        %s643 = sand.u32 %s199, 1
        %s644 = smul.addr %s643, 2
        %s645 = scalar_lea.vmem [#allocation3], %s644
        // Predicated region
        $region49: #{tpu_custom_call.1} parent=47 // pred_check
          %p646 = pneg %p209
        $region50: #{tpu_custom_call.1} parent=47 // pred_check_branch
          %648 = sbr.rel (%p646) target = $region52
        $region51: #{tpu_custom_call.1} parent=47 // pred_region
          %s649 = smul.u32 2, %s28
          %s651 = ssub.s32 32, 32
          %652 = vsyncadd %s642, %s651
          %s653 = smul.addr %s27, 2
          %s654 = sadd.s32 %s649, %s653
          %s655 = smul.addr %s654, 16
          %s656 = scalar_lea.hbm %s7, %s655
          %s658 = sshll.u32 %s645, 4
          %s659 = int_to_ptr.vmem [resolvable:$true] %s658
          %661 = dma.vmem_to_hbm [thread:$0]  %s659, 32, %s656, %s642
        $region52: #{tpu_custom_call.1} parent=47 // pred_fallthru
          _
      $region48: #{tpu_custom_call.1} parent=5 // pred_fallthru
        _
      %p662 = scmp.le.s32.totalorder 2, %s18
      // Predicated region
      $region53: #{tpu_custom_call.1} parent=5 // pred_check
        %p663 = pneg %p662
      $region54: #{tpu_custom_call.1} parent=5 // pred_check_branch
        %665 = sbr.rel (%p663) target = $region56
      $region55: #{tpu_custom_call.1} parent=5 // pred_region
        %s666 = ssub.s32 %s18, 2
        // Predicated region
        $region57: #{tpu_custom_call.1} parent=55 // pred_check
          %p667 = pneg %p215
        $region58: #{tpu_custom_call.1} parent=55 // pred_check_branch
          %669 = sbr.rel (%p667) target = $region60
        $region59: #{tpu_custom_call.1} parent=55 // pred_region
          %s670 = sand.u32 %s200, 1
          %s671 = scalar_lea.sflag [#allocation4], %s670
          %s672 = sand.u32 %s200, 1
          %s673 = smul.addr %s672, 2
          %s674 = scalar_lea.vmem [#allocation3], %s673
          %675 = dma.done %s671, 32
        $region60: #{tpu_custom_call.1} parent=55 // pred_fallthru
          _
      $region56: #{tpu_custom_call.1} parent=5 // pred_fallthru
        _
    $region6: #{tpu_custom_call.1} parent=1 // loop_footer
      %s22 = sadd.s32 1, %s18
    $region7: #{tpu_custom_call.1} parent=1 // loop_footer_branch
      %17 = sbr.rel target = $region3
    $region8: #{tpu_custom_call.1} parent=1 // loop_exit
      _
    %676 = vsyncpa [#allocation4], 1
    %s677 = scalar_lea.sflag [#allocation4], 1
    %678 = vsyncpa %s677, 1

</llo_original>
